<compile_context>
chip_gen: v5e
topology: v5e:2x2
jax: 0.10.0
libtpu: 0.0.40
codegen_flags: <defaults>
</compile_context>

<pallas_src>
import functools

import jax
import jax.numpy as jnp
from jax import lax
from jax.experimental import pallas as pl
from jax.experimental.pallas import tpu as pltpu


# ----------------------------- in-kernel helpers -----------------------------


def _conv3x3(a_f32, w_flat, mask_flat, *, wo, lanes):
    """3x3 'same' conv over a flattened (C, L) slab via one stacked matmul.

    a_f32    : (C, L) f32 activations; L = imgs_per_block * Ho * Wo,
               lane index = img*Ho*Wo + r*Wo + c (row-major pixels, images
               concatenated along lanes).
    w_flat   : (Cout, 9*C) bf16, K index = (kh*3 + kw)*C + cin.
    mask_flat: (9*C, L) f32 combined row/col/image validity mask, same K order.
    Returns (Cout, L) float32.
    """
    taps = []
    for kh in range(3):
        for kw in range(3):
            s = (kh - 1) * wo + (kw - 1)          # static lane offset of tap
            if s == 0:
                taps.append(a_f32)
            else:
                # shifted[i] = a[i + s]; wrapped / out-of-window lanes are
                # zeroed by mask_flat below. roll runs on the XLU slot.
                taps.append(pltpu.roll(a_f32, shift=(-s) % lanes, axis=1))
    patches = jnp.concatenate(taps, axis=0) * mask_flat        # (9*C, L) f32
    return jnp.dot(w_flat, patches.astype(jnp.bfloat16),
                   preferred_element_type=jnp.float32)


# ------------------------------- Pallas kernels -------------------------------


def _pool_conv1_kernel(xt_ref, w_ref, m_ref, y_ref, *, wo, lanes):
    # xt_ref: (1, 4, Cin, L) bf16 — the 4 taps of each 2x2 pooling window.
    p0, p1 = xt_ref[0, 0], xt_ref[0, 1]
    p2, p3 = xt_ref[0, 2], xt_ref[0, 3]
    pooled = jnp.maximum(jnp.maximum(p0, p1), jnp.maximum(p2, p3))  # (Cin, L)
    # conv bias omitted: exactly cancelled by train-mode BN mean subtraction.
    y = _conv3x3(pooled.astype(jnp.float32), w_ref[...], m_ref[...],
                 wo=wo, lanes=lanes)
    y_ref[0] = y.astype(y_ref.dtype)                                # bf16 store


def _bnrelu_conv2_kernel(y1_ref, sc_ref, sh_ref, w_ref, m_ref, y2_ref,
                         *, wo, lanes):
    # BN1 + ReLU fused into conv2's input stage (no extra activation round trip).
    y1 = y1_ref[0].astype(jnp.float32)                              # (Cout, L)
    a = jnp.maximum(y1 * sc_ref[...] + sh_ref[...], 0.0)
    y2 = _conv3x3(a, w_ref[...], m_ref[...], wo=wo, lanes=lanes)
    y2_ref[0] = y2.astype(y2_ref.dtype)


def _bnrelu_kernel(y2_ref, sc_ref, sh_ref, o_ref):
    y2 = y2_ref[0].astype(jnp.float32)
    o_ref[0] = jnp.maximum(y2 * sc_ref[...] + sh_ref[...], 0.0).astype(o_ref.dtype)


# ------------------------------- Down forward --------------------------------


def _imgs_per_block(n, p):
    """Smallest divisor of n whose folded lane width (div*p) is a multiple of 128."""
    best = n
    for cand in range(1, n + 1):
        if n % cand == 0:
            best = cand
            if (cand * p) % 128 == 0:
                break
    return best


@jax.jit
def down_forward(x_nchw, params):
    f32, bf16 = jnp.float32, jnp.bfloat16
    N, Cin, H, W = x_nchw.shape
    Cout = params["w1"].shape[0]
    Ho, Wo = H // 2, W // 2
    P = Ho * Wo

    # Fold images into the lane axis so all slabs are lane-dense.
    IPB = _imgs_per_block(N, P)
    G = N // IPB
    L = IPB * P

    # ---- host-side layout prep (pure relayout, bf16, same element count) ----
    xt = (x_nchw.reshape(N, Cin, Ho, 2, Wo, 2)
                .transpose(0, 3, 5, 1, 2, 4)             # (N, 2, 2, Cin, Ho, Wo)
                .reshape(N, 4, Cin, P)
                .reshape(G, IPB, 4, Cin, P)
                .transpose(0, 2, 3, 1, 4)                # (G, 4, Cin, IPB, P)
                .reshape(G, 4, Cin, L)
                .astype(bf16))

    # Stacked-tap conv weights: (Cout, 9*C) with K index = (kh*3+kw)*C + cin.
    w1f = jnp.transpose(params["w1"], (0, 2, 3, 1)).reshape(Cout, 9 * Cin).astype(bf16)
    w2f = jnp.transpose(params["w2"], (0, 2, 3, 1)).reshape(Cout, 9 * Cout).astype(bf16)

    # Combined per-tap validity masks over the folded lane axis (row + column
    # window bounds; also kills cross-image leakage from the lane roll).
    pix = jnp.arange(P, dtype=jnp.int32)
    row = jnp.tile(pix // Wo, IPB)
    col = jnp.tile(pix % Wo, IPB)
    mrows = []
    for kh in range(3):
        for kw in range(3):
            dh, dw = kh - 1, kw - 1
            ok = ((row + dh >= 0) & (row + dh < Ho)
                  & (col + dw >= 0) & (col + dw < Wo))
            mrows.append(ok)
    mask9 = jnp.stack(mrows).astype(f32)                  # (9, L)
    mask1 = jnp.repeat(mask9, Cin, axis=0)                # (9*Cin, L)
    mask2 = jnp.repeat(mask9, Cout, axis=0)               # (9*Cout, L)

    cparams = pltpu.CompilerParams(
        dimension_semantics=("parallel",),     # shard grid across TCs (v7x)
        vmem_limit_bytes=32 * 1024 * 1024,     # explicit (v5e default is 16 MiB)
    )
    bpe_b, bpe_f = 2, 4

    # -------- kernel A: fused 2x2 maxpool + conv1 -----------------------------
    flops_a = G * (3 * Cin * L + 9 * Cin * L + 2 * Cout * 9 * Cin * L)
    bytes_a = (G * 4 * Cin * L * bpe_b + Cout * 9 * Cin * bpe_b
               + 9 * Cin * L * bpe_f + G * Cout * L * bpe_b)
    y1 = pl.pallas_call(
        functools.partial(_pool_conv1_kernel, wo=Wo, lanes=L),
        grid=(G,),
        in_specs=[
            pl.BlockSpec((1, 4, Cin, L), lambda g: (g, 0, 0, 0)),
            pl.BlockSpec((Cout, 9 * Cin), lambda g: (0, 0)),
            pl.BlockSpec((9 * Cin, L), lambda g: (0, 0)),
        ],
        out_specs=pl.BlockSpec((1, Cout, L), lambda g: (g, 0, 0)),
        out_shape=jax.ShapeDtypeStruct((G, Cout, L), bf16),
        compiler_params=cparams,
        cost_estimate=pl.CostEstimate(flops=flops_a, transcendentals=0,
                                      bytes_accessed=bytes_a),
    )(xt, w1f, mask1)

    def _bn_affine(y_bf, gamma, beta):
        # Train-mode BN (batch stats, biased variance), reduced in XLA from the
        # same bf16 data the next kernel normalizes -> exactly consistent.
        y = y_bf.astype(f32)
        mean = jnp.mean(y, axis=(0, 2))
        var = jnp.mean(y * y, axis=(0, 2)) - mean * mean
        scale = gamma * lax.rsqrt(var + 1e-5)
        shift = beta - mean * scale
        return scale.reshape(Cout, 1), shift.reshape(Cout, 1)

    sc1, sh1 = _bn_affine(y1, params["g1"], params["be1"])

    # -------- kernel B: BN1+ReLU (fused) + conv2 ------------------------------
    flops_b = G * (4 * Cout * L + 9 * Cout * L + 2 * Cout * 9 * Cout * L)
    bytes_b = (G * Cout * L * bpe_b + 2 * Cout * bpe_f
               + Cout * 9 * Cout * bpe_b + 9 * Cout * L * bpe_f
               + G * Cout * L * bpe_b)
    y2 = pl.pallas_call(
        functools.partial(_bnrelu_conv2_kernel, wo=Wo, lanes=L),
        grid=(G,),
        in_specs=[
            pl.BlockSpec((1, Cout, L), lambda g: (g, 0, 0)),
            pl.BlockSpec((Cout, 1), lambda g: (0, 0)),
            pl.BlockSpec((Cout, 1), lambda g: (0, 0)),
            pl.BlockSpec((Cout, 9 * Cout), lambda g: (0, 0)),
            pl.BlockSpec((9 * Cout, L), lambda g: (0, 0)),
        ],
        out_specs=pl.BlockSpec((1, Cout, L), lambda g: (g, 0, 0)),
        out_shape=jax.ShapeDtypeStruct((G, Cout, L), bf16),
        compiler_params=cparams,
        cost_estimate=pl.CostEstimate(flops=flops_b, transcendentals=0,
                                      bytes_accessed=bytes_b),
    )(y1, sc1, sh1, w2f, mask2)

    sc2, sh2 = _bn_affine(y2, params["g2"], params["be2"])

    # -------- kernel C: final BN2 + ReLU (mem-bound, bf16 writeback) ----------
    flops_c = G * 3 * Cout * L
    bytes_c = G * Cout * L * bpe_b + 2 * Cout * bpe_f + G * Cout * L * bpe_b
    out = pl.pallas_call(
        _bnrelu_kernel,
        grid=(G,),
        in_specs=[
            pl.BlockSpec((1, Cout, L), lambda g: (g, 0, 0)),
            pl.BlockSpec((Cout, 1), lambda g: (0, 0)),
            pl.BlockSpec((Cout, 1), lambda g: (0, 0)),
        ],
        out_specs=pl.BlockSpec((1, Cout, L), lambda g: (g, 0, 0)),
        out_shape=jax.ShapeDtypeStruct((G, Cout, L), bf16),
        compiler_params=cparams,
        cost_estimate=pl.CostEstimate(flops=flops_c, transcendentals=0,
                                      bytes_accessed=bytes_c),
    )(y2, sc2, sh2)

    # Unfold images back out of the lane axis -> NCHW.
    out = (out.reshape(G, Cout, IPB, Ho, Wo)
              .transpose(0, 2, 1, 3, 4)
              .reshape(N, Cout, Ho, Wo))
    return out


# --------------------------- parameter construction --------------------------


def _gabor_bank(no_g, k=3, sigma=1.0, lam=2.0, gamma=0.5, psi=0.0):
    half = (k - 1) / 2.0
    yy, xx = jnp.meshgrid(jnp.arange(k, dtype=jnp.float32) - half,
                          jnp.arange(k, dtype=jnp.float32) - half,
                          indexing="ij")
    filts = []
    for g in range(no_g):
        theta = jnp.float32(g) * jnp.pi / no_g
        xr = xx * jnp.cos(theta) + yy * jnp.sin(theta)
        yr = -xx * jnp.sin(theta) + yy * jnp.cos(theta)
        filts.append(
            jnp.exp(-(xr ** 2 + (gamma * yr) ** 2) / (2.0 * sigma ** 2))
            * jnp.cos(2.0 * jnp.pi * xr / lam + psi)
        )
    return jnp.stack(filts)                                   # (no_g, 3, 3)


def _make_igconv_params(key, cin, cout, no_g):
    co = cout // no_g
    kw_, kb_ = jax.random.split(key)
    w0 = jax.random.normal(kw_, (co, cin, 3, 3), jnp.float32) / jnp.sqrt(9.0 * cin)
    b0 = 0.01 * jax.random.normal(kb_, (co,), jnp.float32)
    gab = _gabor_bank(no_g)
    # Gabor-modulated, gabor-major stacked weight: (cout, cin, 3, 3) OIHW.
    w = (w0[None, :, :, :, :] * gab[:, None, None, :, :]).reshape(cout, cin, 3, 3)
    b = jnp.tile(b0, no_g)
    return w, b


def init_down_params(key, in_channels, out_channels, no_g=4):
    k1, k2 = jax.random.split(key)
    w1, b1 = _make_igconv_params(k1, in_channels, out_channels, no_g)
    w2, b2 = _make_igconv_params(k2, out_channels, out_channels, no_g)
    ones = jnp.ones((out_channels,), jnp.float32)
    zeros = jnp.zeros((out_channels,), jnp.float32)
    return dict(w1=w1, b1=b1, g1=ones, be1=zeros,
                w2=w2, b2=b2, g2=ones, be2=zeros)


# ------------------------------ pure-JAX reference ---------------------------


def _ref_conv_bn_relu(x_nhwc, w_oihw, bias, gamma, beta):
    w_hwio = jnp.transpose(w_oihw, (2, 3, 1, 0))
    y = lax.conv_general_dilated(
        x_nhwc, w_hwio, window_strides=(1, 1), padding="SAME",
        dimension_numbers=("NHWC", "HWIO", "NHWC"),
        precision=lax.Precision.HIGHEST,
    ) + bias
    mean = jnp.mean(y, axis=(0, 1, 2), keepdims=True)
    var = jnp.mean(jnp.square(y - mean), axis=(0, 1, 2), keepdims=True)
    y = (y - mean) * lax.rsqrt(var + 1e-5) * gamma + beta
    return jnp.maximum(y, 0.0)


def down_reference(x_nchw, params):
    x = jnp.transpose(x_nchw, (0, 2, 3, 1))
    x = lax.reduce_window(x, -jnp.inf, lax.max,
                          window_dimensions=(1, 2, 2, 1),
                          window_strides=(1, 2, 2, 1),
                          padding="VALID")
    x = _ref_conv_bn_relu(x, params["w1"], params["b1"], params["g1"], params["be1"])
    x = _ref_conv_bn_relu(x, params["w2"], params["b2"], params["g2"], params["be2"])
    return jnp.transpose(x, (0, 3, 1, 2))


# ------------------------------------ main ------------------------------------


if __name__ == "__main__":
    key = jax.random.PRNGKey(0)
    kx, kp = jax.random.split(key)

    N, Cin, H, W = 2, 4, 16, 16
    Cout, no_g = 8, 4

    x = jax.random.normal(kx, (N, Cin, H, W), jnp.float32)
    params = init_down_params(kp, Cin, Cout, no_g=no_g)

    out = down_forward(x, params)
    out = jax.block_until_ready(out)

    assert out.shape == (N, Cout, H // 2, W // 2), out.shape

    # Reference runs the conv path in f32/HIGHEST; the Pallas path uses the
    # native bf16 MXU path with a bf16 writeback, so tolerances are set for
    # bf16-level agreement.
    ref = down_reference(x, params)
    err = jnp.abs(out.astype(jnp.float32) - ref)
    assert float(jnp.max(err)) < 2e-1, float(jnp.max(err))
    assert float(jnp.mean(err)) < 3e-2, float(jnp.mean(err))

    print("KERNEL_OK")
</pallas_src>

<mosaic_0001>
module attributes {stable_mosaic.version = 11 : i64} {
  func.func @_pool_conv1_kernel(%arg0: i32, %arg1: memref<1x4x4x128xbf16, #tpu.memory_space<vmem>>, %arg2: memref<8x36xbf16, #tpu.memory_space<vmem>>, %arg3: memref<36x128xf32, #tpu.memory_space<vmem>>, %arg4: memref<1x8x128xbf16, #tpu.memory_space<vmem>>) attributes {dimension_semantics = [#tpu.dimension_semantics<parallel>], iteration_bounds = array<i64: 1>, scalar_prefetch = 0 : i64, scratch_operands = 0 : i64, tpu.core_type = #tpu.core_type<tc>, window_params = [{transform_indices = @transform_0, window_bounds = array<i64: 1, 4, 4, 128>}, {pipeline_mode = #tpu.pipeline_mode<synchronous>, transform_indices = @transform_1, window_bounds = array<i64: 8, 36>}, {pipeline_mode = #tpu.pipeline_mode<synchronous>, transform_indices = @transform_2, window_bounds = array<i64: 36, 128>}, {transform_indices = @transform_3, window_bounds = array<i64: 1, 8, 128>}]} {
    %c0 = arith.constant 0 : index
    %c0_0 = arith.constant 0 : index
    %c0_1 = arith.constant 0 : index
    %c0_2 = arith.constant 0 : index
    %0 = vector.load %arg1[%c0, %c0_0, %c0_1, %c0_2] : memref<1x4x4x128xbf16, #tpu.memory_space<vmem>>, vector<1x1x4x128xbf16>
    %1 = vector.shape_cast %0 : vector<1x1x4x128xbf16> to vector<4x128xbf16>
    %c0_3 = arith.constant 0 : index
    %c1 = arith.constant 1 : index
    %c0_4 = arith.constant 0 : index
    %c0_5 = arith.constant 0 : index
    %2 = vector.load %arg1[%c0_3, %c1, %c0_4, %c0_5] : memref<1x4x4x128xbf16, #tpu.memory_space<vmem>>, vector<1x1x4x128xbf16>
    %3 = vector.shape_cast %2 : vector<1x1x4x128xbf16> to vector<4x128xbf16>
    %c0_6 = arith.constant 0 : index
    %c2 = arith.constant 2 : index
    %c0_7 = arith.constant 0 : index
    %c0_8 = arith.constant 0 : index
    %4 = vector.load %arg1[%c0_6, %c2, %c0_7, %c0_8] : memref<1x4x4x128xbf16, #tpu.memory_space<vmem>>, vector<1x1x4x128xbf16>
    %5 = vector.shape_cast %4 : vector<1x1x4x128xbf16> to vector<4x128xbf16>
    %c0_9 = arith.constant 0 : index
    %c3 = arith.constant 3 : index
    %c0_10 = arith.constant 0 : index
    %c0_11 = arith.constant 0 : index
    %6 = vector.load %arg1[%c0_9, %c3, %c0_10, %c0_11] : memref<1x4x4x128xbf16, #tpu.memory_space<vmem>>, vector<1x1x4x128xbf16>
    %7 = vector.shape_cast %6 : vector<1x1x4x128xbf16> to vector<4x128xbf16>
    %8 = arith.maximumf %1, %3 : vector<4x128xbf16>
    %9 = arith.maximumf %5, %7 : vector<4x128xbf16>
    %10 = arith.maximumf %8, %9 : vector<4x128xbf16>
    %11 = arith.extf %10 : vector<4x128xbf16> to vector<4x128xf32>
    %c0_12 = arith.constant 0 : index
    %c0_13 = arith.constant 0 : index
    %12 = vector.load %arg2[%c0_12, %c0_13] : memref<8x36xbf16, #tpu.memory_space<vmem>>, vector<8x36xbf16>
    %c0_14 = arith.constant 0 : index
    %c0_15 = arith.constant 0 : index
    %13 = vector.load %arg3[%c0_14, %c0_15] : memref<36x128xf32, #tpu.memory_space<vmem>>, vector<36x128xf32>
    %c9_i32 = arith.constant 9 : i32
    %14 = tpu.dynamic_rotate %11 by %c9_i32 dim 1 : vector<4x128xf32>, i32 -> vector<4x128xf32>
    %c8_i32 = arith.constant 8 : i32
    %15 = tpu.dynamic_rotate %11 by %c8_i32 dim 1 : vector<4x128xf32>, i32 -> vector<4x128xf32>
    %c7_i32 = arith.constant 7 : i32
    %16 = tpu.dynamic_rotate %11 by %c7_i32 dim 1 : vector<4x128xf32>, i32 -> vector<4x128xf32>
    %c1_i32 = arith.constant 1 : i32
    %17 = tpu.dynamic_rotate %11 by %c1_i32 dim 1 : vector<4x128xf32>, i32 -> vector<4x128xf32>
    %c127_i32 = arith.constant 127 : i32
    %18 = tpu.dynamic_rotate %11 by %c127_i32 dim 1 : vector<4x128xf32>, i32 -> vector<4x128xf32>
    %c121_i32 = arith.constant 121 : i32
    %19 = tpu.dynamic_rotate %11 by %c121_i32 dim 1 : vector<4x128xf32>, i32 -> vector<4x128xf32>
    %c120_i32 = arith.constant 120 : i32
    %20 = tpu.dynamic_rotate %11 by %c120_i32 dim 1 : vector<4x128xf32>, i32 -> vector<4x128xf32>
    %c119_i32 = arith.constant 119 : i32
    %21 = tpu.dynamic_rotate %11 by %c119_i32 dim 1 : vector<4x128xf32>, i32 -> vector<4x128xf32>
    %22 = tpu.concatenate %14, %15, %16, %17, %11, %18, %19, %20, %21 in 0 : vector<4x128xf32>, vector<4x128xf32>, vector<4x128xf32>, vector<4x128xf32>, vector<4x128xf32>, vector<4x128xf32>, vector<4x128xf32>, vector<4x128xf32>, vector<4x128xf32> -> vector<36x128xf32>
    %23 = arith.mulf %22, %13 : vector<36x128xf32>
    %24 = arith.truncf %23 : vector<36x128xf32> to vector<36x128xbf16>
    %cst = arith.constant dense<0.000000e+00> : vector<8x128xf32>
    %25 = tpu.matmul %12, %24, %cst {dimension_numbers = #tpu.dot_dimension_numbers<[1], [0], [0], [1], [0, 0, 1, 1], [], []>} : vector<8x36xbf16>, vector<36x128xbf16>, vector<8x128xf32> -> vector<8x128xf32>
    %26 = arith.truncf %25 : vector<8x128xf32> to vector<8x128xbf16>
    %c0_16 = arith.constant 0 : index
    %c0_17 = arith.constant 0 : index
    %c0_18 = arith.constant 0 : index
    %27 = vector.load %arg4[%c0_16, %c0_17, %c0_18] : memref<1x8x128xbf16, #tpu.memory_space<vmem>>, vector<1x8x128xbf16>
    %28 = vector.shape_cast %27 : vector<1x8x128xbf16> to vector<8x128xbf16>
    %29 = vector.shape_cast %26 : vector<8x128xbf16> to vector<1x8x128xbf16>
    tpu.vector_store %arg4[%c0_16, %c0_17, %c0_18], %29 {strides = array<i32>} : memref<1x8x128xbf16, #tpu.memory_space<vmem>>, vector<1x8x128xbf16>,
    return
  }
  func.func @transform_0(%arg0: i32) -> (i32, i32, i32, i32) {
    %c0_i32 = arith.constant 0 : i32
    %c0_i32_0 = arith.constant 0 : i32
    %c0_i32_1 = arith.constant 0 : i32
    %c0_i32_2 = arith.constant 0 : i32
    return %arg0, %c0_i32, %c0_i32_0, %c0_i32_1 : i32, i32, i32, i32
  }
  func.func @transform_1(%arg0: i32) -> (i32, i32) {
    %c0_i32 = arith.constant 0 : i32
    %c0_i32_0 = arith.constant 0 : i32
    %c0_i32_1 = arith.constant 0 : i32
    return %c0_i32, %c0_i32_0 : i32, i32
  }
  func.func @transform_2(%arg0: i32) -> (i32, i32) {
    %c0_i32 = arith.constant 0 : i32
    %c0_i32_0 = arith.constant 0 : i32
    %c0_i32_1 = arith.constant 0 : i32
    return %c0_i32, %c0_i32_0 : i32, i32
  }
  func.func @transform_3(%arg0: i32) -> (i32, i32, i32) {
    %c0_i32 = arith.constant 0 : i32
    %c0_i32_0 = arith.constant 0 : i32
    %c0_i32_1 = arith.constant 0 : i32
    return %arg0, %c0_i32, %c0_i32_0 : i32, i32, i32
  }
}

module attributes {stable_mosaic.version = 11 : i64} {
  func.func @_bnrelu_conv2_kernel(%arg0: i32, %arg1: memref<1x8x128xbf16, #tpu.memory_space<vmem>>, %arg2: memref<8x1xf32, #tpu.memory_space<vmem>>, %arg3: memref<8x1xf32, #tpu.memory_space<vmem>>, %arg4: memref<8x72xbf16, #tpu.memory_space<vmem>>, %arg5: memref<72x128xf32, #tpu.memory_space<vmem>>, %arg6: memref<1x8x128xbf16, #tpu.memory_space<vmem>>) attributes {dimension_semantics = [#tpu.dimension_semantics<parallel>], iteration_bounds = array<i64: 1>, scalar_prefetch = 0 : i64, scratch_operands = 0 : i64, tpu.core_type = #tpu.core_type<tc>, window_params = [{transform_indices = @transform_0, window_bounds = array<i64: 1, 8, 128>}, {pipeline_mode = #tpu.pipeline_mode<synchronous>, transform_indices = @transform_1, window_bounds = array<i64: 8, 1>}, {pipeline_mode = #tpu.pipeline_mode<synchronous>, transform_indices = @transform_2, window_bounds = array<i64: 8, 1>}, {pipeline_mode = #tpu.pipeline_mode<synchronous>, transform_indices = @transform_3, window_bounds = array<i64: 8, 72>}, {pipeline_mode = #tpu.pipeline_mode<synchronous>, transform_indices = @transform_4, window_bounds = array<i64: 72, 128>}, {transform_indices = @transform_5, window_bounds = array<i64: 1, 8, 128>}]} {
    %c0 = arith.constant 0 : index
    %c0_0 = arith.constant 0 : index
    %c0_1 = arith.constant 0 : index
    %0 = vector.load %arg1[%c0, %c0_0, %c0_1] : memref<1x8x128xbf16, #tpu.memory_space<vmem>>, vector<1x8x128xbf16>
    %1 = vector.shape_cast %0 : vector<1x8x128xbf16> to vector<8x128xbf16>
    %2 = arith.extf %1 : vector<8x128xbf16> to vector<8x128xf32>
    %c0_2 = arith.constant 0 : index
    %c0_3 = arith.constant 0 : index
    %3 = vector.load %arg2[%c0_2, %c0_3] : memref<8x1xf32, #tpu.memory_space<vmem>>, vector<8x1xf32>
    %4 = vector.broadcast %3 : vector<8x1xf32> to vector<8x128xf32>
    %5 = arith.mulf %2, %4 : vector<8x128xf32>
    %c0_4 = arith.constant 0 : index
    %c0_5 = arith.constant 0 : index
    %6 = vector.load %arg3[%c0_4, %c0_5] : memref<8x1xf32, #tpu.memory_space<vmem>>, vector<8x1xf32>
    %7 = vector.broadcast %6 : vector<8x1xf32> to vector<8x128xf32>
    %8 = arith.addf %5, %7 : vector<8x128xf32>
    %cst = arith.constant 0.000000e+00 : f32
    %9 = vector.broadcast %cst : f32 to vector<8x128xf32>
    %10 = arith.maximumf %8, %9 : vector<8x128xf32>
    %c0_6 = arith.constant 0 : index
    %c0_7 = arith.constant 0 : index
    %11 = vector.load %arg4[%c0_6, %c0_7] : memref<8x72xbf16, #tpu.memory_space<vmem>>, vector<8x72xbf16>
    %c0_8 = arith.constant 0 : index
    %c0_9 = arith.constant 0 : index
    %12 = vector.load %arg5[%c0_8, %c0_9] : memref<72x128xf32, #tpu.memory_space<vmem>>, vector<72x128xf32>
    %c9_i32 = arith.constant 9 : i32
    %13 = tpu.dynamic_rotate %10 by %c9_i32 dim 1 : vector<8x128xf32>, i32 -> vector<8x128xf32>
    %c8_i32 = arith.constant 8 : i32
    %14 = tpu.dynamic_rotate %10 by %c8_i32 dim 1 : vector<8x128xf32>, i32 -> vector<8x128xf32>
    %c7_i32 = arith.constant 7 : i32
    %15 = tpu.dynamic_rotate %10 by %c7_i32 dim 1 : vector<8x128xf32>, i32 -> vector<8x128xf32>
    %c1_i32 = arith.constant 1 : i32
    %16 = tpu.dynamic_rotate %10 by %c1_i32 dim 1 : vector<8x128xf32>, i32 -> vector<8x128xf32>
    %c127_i32 = arith.constant 127 : i32
    %17 = tpu.dynamic_rotate %10 by %c127_i32 dim 1 : vector<8x128xf32>, i32 -> vector<8x128xf32>
    %c121_i32 = arith.constant 121 : i32
    %18 = tpu.dynamic_rotate %10 by %c121_i32 dim 1 : vector<8x128xf32>, i32 -> vector<8x128xf32>
    %c120_i32 = arith.constant 120 : i32
    %19 = tpu.dynamic_rotate %10 by %c120_i32 dim 1 : vector<8x128xf32>, i32 -> vector<8x128xf32>
    %c119_i32 = arith.constant 119 : i32
    %20 = tpu.dynamic_rotate %10 by %c119_i32 dim 1 : vector<8x128xf32>, i32 -> vector<8x128xf32>
    %21 = tpu.concatenate %13, %14, %15, %16, %10, %17, %18, %19, %20 in 0 : vector<8x128xf32>, vector<8x128xf32>, vector<8x128xf32>, vector<8x128xf32>, vector<8x128xf32>, vector<8x128xf32>, vector<8x128xf32>, vector<8x128xf32>, vector<8x128xf32> -> vector<72x128xf32>
    %22 = arith.mulf %21, %12 : vector<72x128xf32>
    %23 = arith.truncf %22 : vector<72x128xf32> to vector<72x128xbf16>
    %cst_10 = arith.constant dense<0.000000e+00> : vector<8x128xf32>
    %24 = tpu.matmul %11, %23, %cst_10 {dimension_numbers = #tpu.dot_dimension_numbers<[1], [0], [0], [1], [0, 0, 1, 1], [], []>} : vector<8x72xbf16>, vector<72x128xbf16>, vector<8x128xf32> -> vector<8x128xf32>
    %25 = arith.truncf %24 : vector<8x128xf32> to vector<8x128xbf16>
    %c0_11 = arith.constant 0 : index
    %c0_12 = arith.constant 0 : index
    %c0_13 = arith.constant 0 : index
    %26 = vector.load %arg6[%c0_11, %c0_12, %c0_13] : memref<1x8x128xbf16, #tpu.memory_space<vmem>>, vector<1x8x128xbf16>
    %27 = vector.shape_cast %26 : vector<1x8x128xbf16> to vector<8x128xbf16>
    %28 = vector.shape_cast %25 : vector<8x128xbf16> to vector<1x8x128xbf16>
    tpu.vector_store %arg6[%c0_11, %c0_12, %c0_13], %28 {strides = array<i32>} : memref<1x8x128xbf16, #tpu.memory_space<vmem>>, vector<1x8x128xbf16>,
    return
  }
  func.func @transform_0(%arg0: i32) -> (i32, i32, i32) {
    %c0_i32 = arith.constant 0 : i32
    %c0_i32_0 = arith.constant 0 : i32
    %c0_i32_1 = arith.constant 0 : i32
    return %arg0, %c0_i32, %c0_i32_0 : i32, i32, i32
  }
  func.func @transform_1(%arg0: i32) -> (i32, i32) {
    %c0_i32 = arith.constant 0 : i32
    %c0_i32_0 = arith.constant 0 : i32
    %c0_i32_1 = arith.constant 0 : i32
    return %c0_i32, %c0_i32_0 : i32, i32
  }
  func.func @transform_2(%arg0: i32) -> (i32, i32) {
    %c0_i32 = arith.constant 0 : i32
    %c0_i32_0 = arith.constant 0 : i32
    %c0_i32_1 = arith.constant 0 : i32
    return %c0_i32, %c0_i32_0 : i32, i32
  }
  func.func @transform_3(%arg0: i32) -> (i32, i32) {
    %c0_i32 = arith.constant 0 : i32
    %c0_i32_0 = arith.constant 0 : i32
    %c0_i32_1 = arith.constant 0 : i32
    return %c0_i32, %c0_i32_0 : i32, i32
  }
  func.func @transform_4(%arg0: i32) -> (i32, i32) {
    %c0_i32 = arith.constant 0 : i32
    %c0_i32_0 = arith.constant 0 : i32
    %c0_i32_1 = arith.constant 0 : i32
    return %c0_i32, %c0_i32_0 : i32, i32
  }
  func.func @transform_5(%arg0: i32) -> (i32, i32, i32) {
    %c0_i32 = arith.constant 0 : i32
    %c0_i32_0 = arith.constant 0 : i32
    %c0_i32_1 = arith.constant 0 : i32
    return %arg0, %c0_i32, %c0_i32_0 : i32, i32, i32
  }
}

module attributes {stable_mosaic.version = 11 : i64} {
  func.func @_bnrelu_kernel(%arg0: i32, %arg1: memref<1x8x128xbf16, #tpu.memory_space<vmem>>, %arg2: memref<8x1xf32, #tpu.memory_space<vmem>>, %arg3: memref<8x1xf32, #tpu.memory_space<vmem>>, %arg4: memref<1x8x128xbf16, #tpu.memory_space<vmem>>) attributes {dimension_semantics = [#tpu.dimension_semantics<parallel>], iteration_bounds = array<i64: 1>, scalar_prefetch = 0 : i64, scratch_operands = 0 : i64, tpu.core_type = #tpu.core_type<tc>, window_params = [{transform_indices = @transform_0, window_bounds = array<i64: 1, 8, 128>}, {pipeline_mode = #tpu.pipeline_mode<synchronous>, transform_indices = @transform_1, window_bounds = array<i64: 8, 1>}, {pipeline_mode = #tpu.pipeline_mode<synchronous>, transform_indices = @transform_2, window_bounds = array<i64: 8, 1>}, {transform_indices = @transform_3, window_bounds = array<i64: 1, 8, 128>}]} {
    %c0 = arith.constant 0 : index
    %c0_0 = arith.constant 0 : index
    %c0_1 = arith.constant 0 : index
    %0 = vector.load %arg1[%c0, %c0_0, %c0_1] : memref<1x8x128xbf16, #tpu.memory_space<vmem>>, vector<1x8x128xbf16>
    %1 = vector.shape_cast %0 : vector<1x8x128xbf16> to vector<8x128xbf16>
    %2 = arith.extf %1 : vector<8x128xbf16> to vector<8x128xf32>
    %c0_2 = arith.constant 0 : index
    %c0_3 = arith.constant 0 : index
    %3 = vector.load %arg2[%c0_2, %c0_3] : memref<8x1xf32, #tpu.memory_space<vmem>>, vector<8x1xf32>
    %4 = vector.broadcast %3 : vector<8x1xf32> to vector<8x128xf32>
    %5 = arith.mulf %2, %4 : vector<8x128xf32>
    %c0_4 = arith.constant 0 : index
    %c0_5 = arith.constant 0 : index
    %6 = vector.load %arg3[%c0_4, %c0_5] : memref<8x1xf32, #tpu.memory_space<vmem>>, vector<8x1xf32>
    %7 = vector.broadcast %6 : vector<8x1xf32> to vector<8x128xf32>
    %8 = arith.addf %5, %7 : vector<8x128xf32>
    %cst = arith.constant 0.000000e+00 : f32
    %9 = vector.broadcast %cst : f32 to vector<8x128xf32>
    %10 = arith.maximumf %8, %9 : vector<8x128xf32>
    %11 = arith.truncf %10 : vector<8x128xf32> to vector<8x128xbf16>
    %c0_6 = arith.constant 0 : index
    %c0_7 = arith.constant 0 : index
    %c0_8 = arith.constant 0 : index
    %12 = vector.load %arg4[%c0_6, %c0_7, %c0_8] : memref<1x8x128xbf16, #tpu.memory_space<vmem>>, vector<1x8x128xbf16>
    %13 = vector.shape_cast %12 : vector<1x8x128xbf16> to vector<8x128xbf16>
    %14 = vector.shape_cast %11 : vector<8x128xbf16> to vector<1x8x128xbf16>
    tpu.vector_store %arg4[%c0_6, %c0_7, %c0_8], %14 {strides = array<i32>} : memref<1x8x128xbf16, #tpu.memory_space<vmem>>, vector<1x8x128xbf16>,
    return
  }
  func.func @transform_0(%arg0: i32) -> (i32, i32, i32) {
    %c0_i32 = arith.constant 0 : i32
    %c0_i32_0 = arith.constant 0 : i32
    %c0_i32_1 = arith.constant 0 : i32
    return %arg0, %c0_i32, %c0_i32_0 : i32, i32, i32
  }
  func.func @transform_1(%arg0: i32) -> (i32, i32) {
    %c0_i32 = arith.constant 0 : i32
    %c0_i32_0 = arith.constant 0 : i32
    %c0_i32_1 = arith.constant 0 : i32
    return %c0_i32, %c0_i32_0 : i32, i32
  }
  func.func @transform_2(%arg0: i32) -> (i32, i32) {
    %c0_i32 = arith.constant 0 : i32
    %c0_i32_0 = arith.constant 0 : i32
    %c0_i32_1 = arith.constant 0 : i32
    return %c0_i32, %c0_i32_0 : i32, i32
  }
  func.func @transform_3(%arg0: i32) -> (i32, i32, i32) {
    %c0_i32 = arith.constant 0 : i32
    %c0_i32_0 = arith.constant 0 : i32
    %c0_i32_1 = arith.constant 0 : i32
    return %arg0, %c0_i32, %c0_i32_0 : i32, i32, i32
  }
}

</mosaic_0001>

<llo_original>
// kernel: down_forward.5
$region0: #{down_forward.5}
  #allocation0 [shape = 'u32[]', space=smem, size = 0x4, offset = 0x4, fixed_abs, tag = 'smem constant byte address 0x4 - core index']
  #allocation1 [shape = 'u32[72,128]{1,0:T(1,128)}', space=vmem, size = 0x9000, scoped, tag = 'internal scratch']
  %s0 = inlined_call_operand.vmem [shape: bf16[1,8,128], index: 0, kind: input, shape index: {}]
  %s1 = inlined_call_operand.vmem [shape: f32[8,1], index: 1, kind: input, shape index: {}]
  %s2 = inlined_call_operand.vmem [shape: f32[8,1], index: 2, kind: input, shape index: {}]
  %s3 = inlined_call_operand.vmem [shape: bf16[1,8,128], index: 3, kind: output, shape index: {}]
  %s4 = sld [smem:[#allocation0]]
  $region22: #{down_forward.5} parent=0
    _
  %s6 = ssub.s32 1, %s4
  %s7 = scalar_select 0, %s6, %s4
  // Predicated region
  $region2: #{down_forward.5} parent=0 // pred_check
    _
  $region3: #{down_forward.5} parent=0 // pred_check_branch
    %9 = sbr.rel (0) target = $region5
  $region4: #{down_forward.5} parent=0 // pred_region
    _
  $region5: #{down_forward.5} parent=0 // pred_fallthru
    _
  // Predicated region
  $region6: #{down_forward.5} parent=0 // pred_check
    _
  $region7: #{down_forward.5} parent=0 // pred_check_branch
    %11 = sbr.rel (0) target = $region9
  $region8: #{down_forward.5} parent=0 // pred_region
    _
  $region9: #{down_forward.5} parent=0 // pred_fallthru
    _
  // Predicated region
  $region10: #{down_forward.5} parent=0 // pred_check
    _
  $region11: #{down_forward.5} parent=0 // pred_check_branch
    %13 = sbr.rel (0) target = $region13
  $region12: #{down_forward.5} parent=0 // pred_region
    _
  $region13: #{down_forward.5} parent=0 // pred_fallthru
    _
  %v14 = vld [vmem:[%s0] sm:$0xf]
  %v15 = vunpack.c.l.bf16 %v14
  %v16 = vld [vmem:[%s1] sm:$0xff]
  %18 = vset.pattern.permute.xlu0 0
  %19 = vperm.xlu0 %18, %v16
  %v20 = vpop.permute.xlu0 %19
  %v22 = vmul.f32 %v15, %v20
  %v23 = vld [vmem:[%s2] sm:$0xff]
  %25 = vset.pattern.permute.xlu0 0
  %26 = vperm.xlu0 %25, %v23
  %v27 = vpop.permute.xlu0 %26
  %v29 = vadd.f32 %v22, %v27
  %v30 = vmax.f32 %v29, 0.0
  %v31 = vpack.c.bf16 %v30, %v30
  %32 = vst [vmem:[%s3] sm:$0xf] %v31
  // Predicated region
  $region14: #{down_forward.5} parent=0 // pred_check
    _
  $region15: #{down_forward.5} parent=0 // pred_check_branch
    %34 = sbr.rel (0) target = $region17
  $region16: #{down_forward.5} parent=0 // pred_region
    _
  $region17: #{down_forward.5} parent=0 // pred_fallthru
    _
  // Predicated region
  $region18: #{down_forward.5} parent=0 // pred_check
    _
  $region19: #{down_forward.5} parent=0 // pred_check_branch
    %36 = sbr.rel (0) target = $region21
  $region20: #{down_forward.5} parent=0 // pred_region
    _
  $region21: #{down_forward.5} parent=0 // pred_fallthru
    _

// kernel: down_forward.3
$region0: #{down_forward.3}
  #allocation0 [shape = 'u32[]', space=smem, size = 0x4, offset = 0x4, fixed_abs, tag = 'smem constant byte address 0x4 - core index']
  #allocation1 [shape = 'u32[72,128]{1,0:T(1,128)}', space=vmem, size = 0x9000, scoped, tag = 'internal scratch']
  %s0 = inlined_call_operand.vmem [shape: bf16[1,4,4,128], index: 0, kind: input, shape index: {}]
  %s1 = inlined_call_operand.vmem [shape: bf16[8,36], index: 1, kind: input, shape index: {}]
  %s2 = inlined_call_operand.vmem [shape: f32[36,128], index: 2, kind: input, shape index: {}]
  %s3 = inlined_call_operand.vmem [shape: bf16[1,8,128], index: 3, kind: output, shape index: {}]
  %s4 = sld [smem:[#allocation0]]
  $region22: #{down_forward.3} parent=0
    _
  %s6 = ssub.s32 1, %s4
  %s7 = scalar_select 0, %s6, %s4
  // Predicated region
  $region2: #{down_forward.3} parent=0 // pred_check
    _
  $region3: #{down_forward.3} parent=0 // pred_check_branch
    %9 = sbr.rel (0) target = $region5
  $region4: #{down_forward.3} parent=0 // pred_region
    _
  $region5: #{down_forward.3} parent=0 // pred_fallthru
    _
  // Predicated region
  $region6: #{down_forward.3} parent=0 // pred_check
    _
  $region7: #{down_forward.3} parent=0 // pred_check_branch
    %11 = sbr.rel (0) target = $region9
  $region8: #{down_forward.3} parent=0 // pred_region
    _
  $region9: #{down_forward.3} parent=0 // pred_fallthru
    _
  // Predicated region
  $region10: #{down_forward.3} parent=0 // pred_check
    _
  $region11: #{down_forward.3} parent=0 // pred_check_branch
    %13 = sbr.rel (0) target = $region13
  $region12: #{down_forward.3} parent=0 // pred_region
    _
  $region13: #{down_forward.3} parent=0 // pred_fallthru
    _
  %v15 = vld [vmem:[%s0] sm:$0x3]
  %s16 = scalar_lea.vmem %s0, 2
  %v17 = vld [vmem:[%s16] sm:$0x3]
  %s18 = scalar_lea.vmem %s0, 4
  %v19 = vld [vmem:[%s18] sm:$0x3]
  %s20 = scalar_lea.vmem %s0, 6
  %v21 = vld [vmem:[%s20] sm:$0x3]
  %v22 = vunpack.c.l.bf16 %v15
  %v23 = vunpack.c.l.bf16 %v17
  %v24 = vmax.f32 %v22, %v23
  %v25 = vpack.c.bf16 %v24, %v24
  %v26 = vunpack.c.l.bf16 %v19
  %v27 = vunpack.c.l.bf16 %v21
  %v28 = vmax.f32 %v26, %v27
  %v29 = vpack.c.bf16 %v28, %v28
  %v30 = vunpack.c.l.bf16 %v25
  %v31 = vunpack.c.l.bf16 %v29
  %v32 = vmax.f32 %v30, %v31
  %v33 = vpack.c.bf16 %v32, %v32
  %v34 = vunpack.c.l.bf16 %v33
  %v35 = vld [vmem:[%s1] sm:$0xf]
  %v36 = vld [vmem:[%s2] sm:$0xff]
  %v37 = vld [vmem:[%s2 + $0x8] sm:$0xff]
  %v38 = vld [vmem:[%s2 + $0x10] sm:$0xff]
  %v39 = vld [vmem:[%s2 + $0x18] sm:$0xff]
  %v40 = vld [vmem:[%s2 + $0x20] sm:$0xf]
  %41 = vrot.lane.b32.xlu0 %v34, 9
  %v42 = vpop.permute.xlu0 %41
  %43 = vrot.lane.b32.xlu0 %v34, 8
  %v44 = vpop.permute.xlu0 %43
  %45 = vrot.lane.b32.xlu0 %v34, 7
  %v46 = vpop.permute.xlu0 %45
  %47 = vrot.lane.b32.xlu0 %v34, 1
  %v48 = vpop.permute.xlu0 %47
  %49 = vrot.lane.b32.xlu0 %v34, 127
  %v50 = vpop.permute.xlu0 %49
  %51 = vrot.lane.b32.xlu0 %v34, 121
  %v52 = vpop.permute.xlu0 %51
  %53 = vrot.lane.b32.xlu0 %v34, 120
  %v54 = vpop.permute.xlu0 %53
  %55 = vrot.lane.b32.xlu0 %v34, 119
  %v56 = vpop.permute.xlu0 %55
  %v58 = vrot.slane %v44, 4
  %v61 = vrot.slane %v48, 4
  %v64 = vrot.slane %v50, 4
  %v67 = vrot.slane %v54, 4
  %vm69 = vcmask 1043456
  %v70 = vsel %vm69, %v42, %v58
  %v71 = vsel %vm69, %v46, %v61
  %v72 = vsel %vm69, %v34, %v64
  %v73 = vsel %vm69, %v52, %v67
  %v74 = vmul.f32 %v70, %v36
  %v75 = vmul.f32 %v71, %v37
  %v76 = vmul.f32 %v72, %v38
  %v77 = vmul.f32 %v73, %v39
  %v78 = vmul.f32 %v56, %v40
  %v79 = vpack.c.bf16 %v75, %v74
  %v80 = vpack.c.bf16 %v77, %v76
  %v81 = vpack.c.bf16 %v78, %v78
  %vm82 = vcmask 293888
  %v84 = vsel %vm82, %v35, 0
  %vm86 = vcmask 1041408
  %v88 = vsel %vm86, %v81, 0
  %90 = vmatpush.bf16.msra.mxu0 0
  %91 = vmatpush.bf16.msra.mxu0 0
  %92 = vmatpush.bf16.msra.mxu0 0
  %93 = vmatpush.bf16.msra.mxu0 0
  %94 = vmatpush.bf16.msra.mxu0 0
  %95 = vmatpush.bf16.msra.mxu0 %v88
  %96 = vmatpush.bf16.msra.mxu0 %v80
  %97 = vmatpush.bf16.msra.mxu0 %v79
  %98 = vmatmul.bf16.gmra.mxu0 %v84
  %v99 = vpop.f32.mrf.mxu0
  %v100 = vadd.f32 0.0, %v99
  %v101 = vpop.f32.mrf.mxu0
  %102 = vdwg.mxu0
  %v103 = vpack.c.bf16 %v100, %v100
  %104 = vst [vmem:[%s3] sm:$0xf] %v103
  // Predicated region
  $region14: #{down_forward.3} parent=0 // pred_check
    _
  $region15: #{down_forward.3} parent=0 // pred_check_branch
    %106 = sbr.rel (0) target = $region17
  $region16: #{down_forward.3} parent=0 // pred_region
    _
  $region17: #{down_forward.3} parent=0 // pred_fallthru
    _
  // Predicated region
  $region18: #{down_forward.3} parent=0 // pred_check
    _
  $region19: #{down_forward.3} parent=0 // pred_check_branch
    %108 = sbr.rel (0) target = $region21
  $region20: #{down_forward.3} parent=0 // pred_region
    _
  $region21: #{down_forward.3} parent=0 // pred_fallthru
    _

// kernel: down_forward.4
$region0: #{down_forward.4}
  #allocation0 [shape = 'u32[]', space=smem, size = 0x4, offset = 0x4, fixed_abs, tag = 'smem constant byte address 0x4 - core index']
  #allocation1 [shape = 'u32[72,128]{1,0:T(1,128)}', space=vmem, size = 0x9000, scoped, tag = 'internal scratch']
  %s0 = inlined_call_operand.vmem [shape: bf16[1,8,128], index: 0, kind: input, shape index: {}]
  %s1 = inlined_call_operand.vmem [shape: f32[8,1], index: 1, kind: input, shape index: {}]
  %s2 = inlined_call_operand.vmem [shape: f32[8,1], index: 2, kind: input, shape index: {}]
  %s3 = inlined_call_operand.vmem [shape: bf16[8,72], index: 3, kind: input, shape index: {}]
  %s4 = inlined_call_operand.vmem [shape: f32[72,128], index: 4, kind: input, shape index: {}]
  %s5 = inlined_call_operand.vmem [shape: bf16[1,8,128], index: 5, kind: output, shape index: {}]
  %s6 = sld [smem:[#allocation0]]
  $region30: #{down_forward.4} parent=0
    _
  %s8 = ssub.s32 1, %s6
  %s9 = scalar_select 0, %s8, %s6
  // Predicated region
  $region2: #{down_forward.4} parent=0 // pred_check
    _
  $region3: #{down_forward.4} parent=0 // pred_check_branch
    %11 = sbr.rel (0) target = $region5
  $region4: #{down_forward.4} parent=0 // pred_region
    _
  $region5: #{down_forward.4} parent=0 // pred_fallthru
    _
  // Predicated region
  $region6: #{down_forward.4} parent=0 // pred_check
    _
  $region7: #{down_forward.4} parent=0 // pred_check_branch
    %13 = sbr.rel (0) target = $region9
  $region8: #{down_forward.4} parent=0 // pred_region
    _
  $region9: #{down_forward.4} parent=0 // pred_fallthru
    _
  // Predicated region
  $region10: #{down_forward.4} parent=0 // pred_check
    _
  $region11: #{down_forward.4} parent=0 // pred_check_branch
    %15 = sbr.rel (0) target = $region13
  $region12: #{down_forward.4} parent=0 // pred_region
    _
  $region13: #{down_forward.4} parent=0 // pred_fallthru
    _
  // Predicated region
  $region14: #{down_forward.4} parent=0 // pred_check
    _
  $region15: #{down_forward.4} parent=0 // pred_check_branch
    %17 = sbr.rel (0) target = $region17
  $region16: #{down_forward.4} parent=0 // pred_region
    _
  $region17: #{down_forward.4} parent=0 // pred_fallthru
    _
  // Predicated region
  $region18: #{down_forward.4} parent=0 // pred_check
    _
  $region19: #{down_forward.4} parent=0 // pred_check_branch
    %19 = sbr.rel (0) target = $region21
  $region20: #{down_forward.4} parent=0 // pred_region
    _
  $region21: #{down_forward.4} parent=0 // pred_fallthru
    _
  %v21 = vld [vmem:[%s0] sm:$0xf]
  %v22 = vunpack.c.l.bf16 %v21
  %v23 = vld [vmem:[%s1] sm:$0xff]
  %25 = vset.pattern.permute.xlu0 0
  %26 = vperm.xlu0 %25, %v23
  %v27 = vpop.permute.xlu0 %26
  %v29 = vmul.f32 %v22, %v27
  %v30 = vld [vmem:[%s2] sm:$0xff]
  %32 = vset.pattern.permute.xlu0 0
  %33 = vperm.xlu0 %32, %v30
  %v34 = vpop.permute.xlu0 %33
  %v36 = vadd.f32 %v29, %v34
  %v37 = vmax.f32 %v36, 0.0
  %v38 = vld [vmem:[%s3] sm:$0xf]
  %v39 = vld [vmem:[%s4] sm:$0xff]
  %v40 = vld [vmem:[%s4 + $0x8] sm:$0xff]
  %v41 = vld [vmem:[%s4 + $0x10] sm:$0xff]
  %v42 = vld [vmem:[%s4 + $0x18] sm:$0xff]
  %v43 = vld [vmem:[%s4 + $0x20] sm:$0xff]
  %v44 = vld [vmem:[%s4 + $0x28] sm:$0xff]
  %v45 = vld [vmem:[%s4 + $0x30] sm:$0xff]
  %v46 = vld [vmem:[%s4 + $0x38] sm:$0xff]
  %v47 = vld [vmem:[%s4 + $0x40] sm:$0xff]
  %48 = vrot.lane.b32.xlu0 %v37, 9
  %v49 = vpop.permute.xlu0 %48
  %50 = vrot.lane.b32.xlu0 %v37, 8
  %v51 = vpop.permute.xlu0 %50
  %52 = vrot.lane.b32.xlu0 %v37, 7
  %v53 = vpop.permute.xlu0 %52
  %54 = vrot.lane.b32.xlu0 %v37, 1
  %v55 = vpop.permute.xlu0 %54
  %56 = vrot.lane.b32.xlu0 %v37, 127
  %v57 = vpop.permute.xlu0 %56
  %58 = vrot.lane.b32.xlu0 %v37, 121
  %v59 = vpop.permute.xlu0 %58
  %60 = vrot.lane.b32.xlu0 %v37, 120
  %v61 = vpop.permute.xlu0 %60
  %62 = vrot.lane.b32.xlu0 %v37, 119
  %v63 = vpop.permute.xlu0 %62
  %v64 = vmul.f32 %v49, %v39
  %v65 = vmul.f32 %v51, %v40
  %v66 = vmul.f32 %v53, %v41
  %v67 = vmul.f32 %v55, %v42
  %v68 = vmul.f32 %v37, %v43
  %v69 = vmul.f32 %v57, %v44
  %v70 = vmul.f32 %v59, %v45
  %v71 = vmul.f32 %v61, %v46
  %v72 = vmul.f32 %v63, %v47
  %v73 = vpack.c.bf16 %v65, %v64
  %v74 = vpack.c.bf16 %v67, %v66
  %v75 = vpack.c.bf16 %v69, %v68
  %v76 = vpack.c.bf16 %v71, %v70
  %v77 = vpack.c.bf16 %v72, %v72
  %vm78 = vcmask 588800
  %v80 = vsel %vm78, %v38, 0
  %vm82 = vcmask 1043456
  %v84 = vsel %vm82, %v77, 0
  %86 = vmatpush.bf16.msra.mxu0 0
  %87 = vmatpush.bf16.msra.mxu0 0
  %88 = vmatpush.bf16.msra.mxu0 0
  %89 = vmatpush.bf16.msra.mxu0 %v84
  %90 = vmatpush.bf16.msra.mxu0 %v76
  %91 = vmatpush.bf16.msra.mxu0 %v75
  %92 = vmatpush.bf16.msra.mxu0 %v74
  %93 = vmatpush.bf16.msra.mxu0 %v73
  %94 = vmatmul.bf16.gmra.mxu0 %v80
  %v95 = vpop.f32.mrf.mxu0
  %v96 = vadd.f32 0.0, %v95
  %v97 = vpop.f32.mrf.mxu0
  %98 = vdwg.mxu0
  %v99 = vpack.c.bf16 %v96, %v96
  %100 = vst [vmem:[%s5] sm:$0xf] %v99
  // Predicated region
  $region22: #{down_forward.4} parent=0 // pred_check
    _
  $region23: #{down_forward.4} parent=0 // pred_check_branch
    %102 = sbr.rel (0) target = $region25
  $region24: #{down_forward.4} parent=0 // pred_region
    _
  $region25: #{down_forward.4} parent=0 // pred_fallthru
    _
  // Predicated region
  $region26: #{down_forward.4} parent=0 // pred_check
    _
  $region27: #{down_forward.4} parent=0 // pred_check_branch
    %104 = sbr.rel (0) target = $region29
  $region28: #{down_forward.4} parent=0 // pred_region
    _
  $region29: #{down_forward.4} parent=0 // pred_fallthru
    _

</llo_original>
